<compile_context>
chip_gen: v7x
topology: tpu7x:2x2x1
jax: 0.10.0
libtpu: 0.0.40
codegen_flags: <defaults>
</compile_context>

<pallas_src>
import functools

import jax
import jax.numpy as jnp
from jax import lax
from jax.experimental import pallas as pl
from jax.experimental.pallas import tpu as pltpu


_NEG = -1e30  # finite "masked out" value (avoids -inf -> NaN hazards)


def _get_vmem_limit():
    """Generation-aware VMEM budget with headroom (v5e/v6e 128 MiB, v7x 64 MiB)."""
    try:
        cap = int(pltpu.get_tpu_info().vmem_capacity_bytes)
    except Exception:
        cap = 64 * 1024 * 1024
    return max(32 * 1024 * 1024, min(int(cap * 0.85), 110 * 1024 * 1024))


_VMEM_LIMIT = _get_vmem_limit()


def _pick_tile(dim, pref, align=8):
    """Largest tile <= pref (multiple of `align`) dividing dim; else full dim."""
    if dim <= pref:
        return dim
    for t in range(pref, align - 1, -align):
        if dim % t == 0:
            return t
    return dim  # TODO(synk): pad awkward dims instead of a full-size fallback.


# ----------------------------------------------------------------------------
# Dense (bias) — used for the final vocab projection.  K = E fits in one pass,
# so there is no reduction grid axis and no accumulator; tiles are lane-dense.
# ----------------------------------------------------------------------------
def _dense_kernel(x_ref, w_ref, b_ref, o_ref):
    o_ref[...] = (
        jnp.dot(x_ref[...], w_ref[...], preferred_element_type=jnp.float32)
        + b_ref[...]
    ).astype(o_ref.dtype)


def dense(x, w, b, tm=256, tn=1024):
    """y = x @ w + b (f32 out). x: (M,K) bf16, w: (K,N) bf16, b: (1,N) f32."""
    M, K = x.shape
    N = w.shape[1]
    tm = _pick_tile(M, tm)
    tn = _pick_tile(N, tn, align=128)
    cost = pl.CostEstimate(
        flops=2 * M * N * K,
        transcendentals=0,
        bytes_accessed=2 * (M * K + K * N) + 4 * (N + M * N),
    )
    return pl.pallas_call(
        _dense_kernel,
        out_shape=jax.ShapeDtypeStruct((M, N), jnp.float32),
        grid=(M // tm, N // tn),
        in_specs=[
            pl.BlockSpec((tm, K), lambda i, j: (i, 0)),
            pl.BlockSpec((K, tn), lambda i, j: (0, j)),
            pl.BlockSpec((1, tn), lambda i, j: (0, j)),
        ],
        out_specs=pl.BlockSpec((tm, tn), lambda i, j: (i, j)),
        compiler_params=pltpu.CompilerParams(
            dimension_semantics=("parallel", "parallel"),
            vmem_limit_bytes=_VMEM_LIMIT,
        ),
        cost_estimate=cost,
    )(x, w, b)


# ----------------------------------------------------------------------------
# Fused Q/K/V (or K/V) projection: one matmul, columns split into n_out chunks.
# Epilogue slices the VMEM accumulator ref per chunk (no full-width vreg load).
# ----------------------------------------------------------------------------
def _proj_split_kernel(x_ref, w_ref, *refs, nk, n_out, chunk):
    out_refs = refs[:n_out]
    acc_ref = refs[n_out]
    k = pl.program_id(1)

    @pl.when(k == 0)
    def _():
        acc_ref[...] = jnp.zeros_like(acc_ref)

    acc_ref[...] += jnp.dot(x_ref[...], w_ref[...],
                            preferred_element_type=jnp.float32)

    @pl.when(k == nk - 1)
    def _():
        for c in range(n_out):
            out_refs[c][...] = acc_ref[:, c * chunk:(c + 1) * chunk].astype(
                out_refs[c].dtype)


def proj_split(x, w, n_out, tm=256, tk=512):
    """y = x @ w (no bias, bf16 out); returns tuple of n_out equal column chunks."""
    M, K = x.shape
    n_total = w.shape[1]
    chunk = n_total // n_out
    tm = _pick_tile(M, tm)
    tk = _pick_tile(K, tk)
    nk = K // tk
    kernel = functools.partial(_proj_split_kernel, nk=nk, n_out=n_out, chunk=chunk)
    return pl.pallas_call(
        kernel,
        out_shape=tuple(
            jax.ShapeDtypeStruct((M, chunk), jnp.bfloat16) for _ in range(n_out)),
        grid=(M // tm, nk),
        in_specs=[
            pl.BlockSpec((tm, tk), lambda i, k: (i, k)),
            pl.BlockSpec((tk, n_total), lambda i, k: (k, 0)),
        ],
        out_specs=tuple(
            pl.BlockSpec((tm, chunk), lambda i, k: (i, 0)) for _ in range(n_out)),
        scratch_shapes=[pltpu.VMEM((tm, n_total), jnp.float32)],
        compiler_params=pltpu.CompilerParams(
            dimension_semantics=("parallel", "arbitrary"),
            vmem_limit_bytes=_VMEM_LIMIT,
        ),
    )(x, w)


# ----------------------------------------------------------------------------
# Dense + residual add + LayerNorm fused epilogue (fc_out projection -> norm).
# ----------------------------------------------------------------------------
def _dense_add_ln_kernel(x_ref, w_ref, b_ref, r_ref, g_ref, bt_ref, o_ref,
                         acc_ref, *, nk, eps):
    k = pl.program_id(1)

    @pl.when(k == 0)
    def _():
        acc_ref[...] = jnp.zeros_like(acc_ref)

    acc_ref[...] += jnp.dot(x_ref[...], w_ref[...],
                            preferred_element_type=jnp.float32)

    @pl.when(k == nk - 1)
    def _():
        y = acc_ref[...] + b_ref[...] + r_ref[...].astype(jnp.float32)
        mu = jnp.mean(y, axis=-1, keepdims=True)
        var = jnp.mean(jnp.square(y - mu), axis=-1, keepdims=True)
        o_ref[...] = (((y - mu) * lax.rsqrt(var + eps)) * g_ref[...]
                      + bt_ref[...]).astype(o_ref.dtype)


def dense_add_layernorm(x, w, b, res, gamma, beta, eps=1e-5, tm=256, tk=512):
    """LayerNorm(x @ w + b + res), bf16 out. x:(M,K), w:(K,E), res:(M,E)."""
    M, K = x.shape
    E = w.shape[1]
    tm = _pick_tile(M, tm)
    tk = _pick_tile(K, tk)
    nk = K // tk
    kernel = functools.partial(_dense_add_ln_kernel, nk=nk, eps=eps)
    return pl.pallas_call(
        kernel,
        out_shape=jax.ShapeDtypeStruct((M, E), jnp.bfloat16),
        grid=(M // tm, nk),
        in_specs=[
            pl.BlockSpec((tm, tk), lambda i, k: (i, k)),
            pl.BlockSpec((tk, E), lambda i, k: (k, 0)),
            pl.BlockSpec((1, E), lambda i, k: (0, 0)),
            pl.BlockSpec((tm, E), lambda i, k: (i, 0)),
            pl.BlockSpec((1, E), lambda i, k: (0, 0)),
            pl.BlockSpec((1, E), lambda i, k: (0, 0)),
        ],
        out_specs=pl.BlockSpec((tm, E), lambda i, k: (i, 0)),
        scratch_shapes=[pltpu.VMEM((tm, E), jnp.float32)],
        compiler_params=pltpu.CompilerParams(
            dimension_semantics=("parallel", "arbitrary"),
            vmem_limit_bytes=_VMEM_LIMIT,
        ),
    )(x, w, b, res, gamma, beta)


# ----------------------------------------------------------------------------
# Fused FFN + residual + LayerNorm with a TILED hidden dimension:
#   LN(relu(x@W1 + b1) @ W2 + b2 + x), hidden streamed th at a time.
# ----------------------------------------------------------------------------
def _ffn_ln_kernel(x_ref, w1_ref, b1_ref, w2_ref, b2_ref, g_ref, bt_ref, o_ref,
                   acc_ref, *, nh, eps):
    hi = pl.program_id(1)

    @pl.when(hi == 0)
    def _():
        acc_ref[...] = jnp.zeros_like(acc_ref)

    x = x_ref[...]                                               # (tm, E) bf16
    h = jnp.dot(x, w1_ref[...], preferred_element_type=jnp.float32) + b1_ref[...]
    h = jnp.maximum(h, 0.0)
    acc_ref[...] += jnp.dot(h.astype(jnp.bfloat16), w2_ref[...],
                            preferred_element_type=jnp.float32)

    @pl.when(hi == nh - 1)
    def _():
        y = acc_ref[...] + b2_ref[...] + x.astype(jnp.float32)
        mu = jnp.mean(y, axis=-1, keepdims=True)
        var = jnp.mean(jnp.square(y - mu), axis=-1, keepdims=True)
        o_ref[...] = (((y - mu) * lax.rsqrt(var + eps)) * g_ref[...]
                      + bt_ref[...]).astype(o_ref.dtype)


def ffn_layernorm(x, w1, b1, w2, b2, gamma, beta, eps=1e-5, tm=256, th=512):
    M, E = x.shape
    H = w1.shape[1]
    tm = _pick_tile(M, tm)
    th = _pick_tile(H, th, align=128)
    nh = H // th
    kernel = functools.partial(_ffn_ln_kernel, nh=nh, eps=eps)
    cost = pl.CostEstimate(
        flops=4 * M * E * H,
        transcendentals=0,
        bytes_accessed=2 * (2 * M * E + 2 * E * H) + 4 * (H + 3 * E),
    )
    return pl.pallas_call(
        kernel,
        out_shape=jax.ShapeDtypeStruct((M, E), jnp.bfloat16),
        grid=(M // tm, nh),
        in_specs=[
            pl.BlockSpec((tm, E), lambda i, h: (i, 0)),
            pl.BlockSpec((E, th), lambda i, h: (0, h)),
            pl.BlockSpec((1, th), lambda i, h: (0, h)),
            pl.BlockSpec((th, E), lambda i, h: (h, 0)),
            pl.BlockSpec((1, E), lambda i, h: (0, 0)),
            pl.BlockSpec((1, E), lambda i, h: (0, 0)),
            pl.BlockSpec((1, E), lambda i, h: (0, 0)),
        ],
        out_specs=pl.BlockSpec((tm, E), lambda i, h: (i, 0)),
        scratch_shapes=[pltpu.VMEM((tm, E), jnp.float32)],
        compiler_params=pltpu.CompilerParams(
            dimension_semantics=("parallel", "arbitrary"),
            vmem_limit_bytes=_VMEM_LIMIT,
        ),
        cost_estimate=cost,
    )(x, w1, b1, w2, b2, gamma, beta)


# ----------------------------------------------------------------------------
# Flash-style multi-head attention: grid=(N, heads, Lq tiles, Lk tiles),
# online-softmax scratch (m, l, acc), masks built in-kernel.
# Layout is (N, heads, L, D) so the head split happens in the BlockSpec DMA.
# ----------------------------------------------------------------------------
def _flash_attn_kernel(q_ref, k_ref, v_ref, kvalid_ref, o_ref,
                       m_sc, l_sc, acc_sc, *, scale, causal, tq, tk):
    ki = pl.program_id(3)

    @pl.when(ki == 0)
    def _():
        m_sc[...] = jnp.full_like(m_sc, _NEG)
        l_sc[...] = jnp.zeros_like(l_sc)
        acc_sc[...] = jnp.zeros_like(acc_sc)

    q = q_ref[...]                                               # (tq, D) bf16
    k = k_ref[...]                                               # (tk, D) bf16
    s = jnp.dot(q, k.T, preferred_element_type=jnp.float32) * scale  # (tq, tk)

    valid = jnp.broadcast_to(kvalid_ref[...] > 0.5, (tq, tk))    # key padding
    if causal:
        qi = pl.program_id(2)
        row = qi * tq + lax.broadcasted_iota(jnp.int32, (tq, tk), 0)
        col = ki * tk + lax.broadcasted_iota(jnp.int32, (tq, tk), 1)
        valid = jnp.logical_and(valid, row >= col)
    s = jnp.where(valid, s, _NEG)

    m_prev = m_sc[...]
    m_new = jnp.maximum(m_prev, jnp.max(s, axis=-1, keepdims=True))
    alpha = jnp.exp(m_prev - m_new)
    p = jnp.exp(s - m_new)
    l_sc[...] = alpha * l_sc[...] + jnp.sum(p, axis=-1, keepdims=True)
    acc_sc[...] = alpha * acc_sc[...] + jnp.dot(
        p.astype(jnp.bfloat16), v_ref[...], preferred_element_type=jnp.float32)
    m_sc[...] = m_new

    @pl.when(ki == pl.num_programs(3) - 1)
    def _():
        o_ref[...] = (acc_sc[...] *
                      pl.reciprocal(l_sc[...], approx=True)).astype(o_ref.dtype)


def attention(q, k, v, kvalid, scale, causal, tq=256, tk=256):
    """q: (N,H,Lq,D), k/v: (N,H,Lk,D), kvalid: (N,1,Lk) -> (N,H,Lq,D) bf16."""
    N, H, Lq, D = q.shape
    Lk = k.shape[2]
    tq = _pick_tile(Lq, tq)
    tk = _pick_tile(Lk, tk)
    kernel = functools.partial(_flash_attn_kernel, scale=scale, causal=causal,
                               tq=tq, tk=tk)
    return pl.pallas_call(
        kernel,
        out_shape=jax.ShapeDtypeStruct((N, H, Lq, D), jnp.bfloat16),
        grid=(N, H, Lq // tq, Lk // tk),
        in_specs=[
            pl.BlockSpec((None, None, tq, D), lambda n, h, qi, ki: (n, h, qi, 0)),
            pl.BlockSpec((None, None, tk, D), lambda n, h, qi, ki: (n, h, ki, 0)),
            pl.BlockSpec((None, None, tk, D), lambda n, h, qi, ki: (n, h, ki, 0)),
            pl.BlockSpec((None, 1, tk), lambda n, h, qi, ki: (n, 0, ki)),
        ],
        out_specs=pl.BlockSpec((None, None, tq, D),
                               lambda n, h, qi, ki: (n, h, qi, 0)),
        scratch_shapes=[
            pltpu.VMEM((tq, 1), jnp.float32),      # running max m
            pltpu.VMEM((tq, 1), jnp.float32),      # running denom l
            pltpu.VMEM((tq, D), jnp.float32),      # output accumulator
        ],
        compiler_params=pltpu.CompilerParams(
            dimension_semantics=("parallel", "parallel", "parallel", "arbitrary"),
            vmem_limit_bytes=_VMEM_LIMIT,
        ),
    )(q, k, v, kvalid)


# ----------------------------------------------------------------------------
# Model glue (plain JAX; calls the Pallas kernels above)
# ----------------------------------------------------------------------------
def mhsa_core(p, x_q, x_kv, kvalid, causal, heads, embed_size):
    """Head-concatenated attention output (N, Lq, E) bf16, before fc_out."""
    N, Lq, E = x_q.shape
    Lk = x_kv.shape[1]
    D = E // heads
    scale = 1.0 / (embed_size ** 0.5)   # reference scales by sqrt(embed_size)
    if x_q is x_kv:                     # self-attention: fused q/k/v matmul
        q, k, v = proj_split(x_q.reshape(-1, E), p["Wqkv"], 3)
    else:                               # cross-attention: fused k/v, separate q
        (q,) = proj_split(x_q.reshape(-1, E), p["Wqkv"][:, :E], 1)
        k, v = proj_split(x_kv.reshape(-1, E), p["Wqkv"][:, E:], 2)
    q = q.reshape(N, Lq, heads, D).transpose(0, 2, 1, 3)
    k = k.reshape(N, Lk, heads, D).transpose(0, 2, 1, 3)
    v = v.reshape(N, Lk, heads, D).transpose(0, 2, 1, 3)
    o = attention(q, k, v, kvalid, scale, causal)      # (N, H, Lq, D)
    return o.transpose(0, 2, 1, 3).reshape(N, Lq, E)


def transformer_block_forward(p, x_kv, x_q, kvalid, heads, embed_size):
    N, Lq, E = x_q.shape
    attn = mhsa_core(p["attn"], x_q, x_kv, kvalid, False, heads, embed_size)
    x = dense_add_layernorm(
        attn.reshape(-1, E), p["attn"]["Wo"], p["attn"]["bo"],
        x_q.reshape(-1, E), p["ln1_g"], p["ln1_b"])
    out = ffn_layernorm(x, p["W1"], p["b1"], p["W2"], p["b2"],
                        p["ln2_g"], p["ln2_b"])
    return out.reshape(N, Lq, E)


def decoder_block_forward(p, x, enc_out, src_kvalid, heads, embed_size):
    N, Lt, E = x.shape
    ones_valid = jnp.ones((N, 1, Lt), jnp.float32)   # trg mask is purely causal
    attn = mhsa_core(p["self_attn"], x, x, ones_valid, True, heads, embed_size)
    query = dense_add_layernorm(
        attn.reshape(-1, E), p["self_attn"]["Wo"], p["self_attn"]["bo"],
        x.reshape(-1, E), p["ln_g"], p["ln_b"]).reshape(N, Lt, E)
    return transformer_block_forward(p["tblock"], enc_out, query, src_kvalid,
                                     heads, embed_size)


def encoder_forward(p, src, src_kvalid, cfg):
    N, L = src.shape
    out = p["word_emb"][src] + p["pos_emb"][jnp.arange(L)][None, :, :]
    out = out.astype(jnp.bfloat16)
    for layer in p["layers"]:
        out = transformer_block_forward(layer, out, out, src_kvalid,
                                        cfg["heads"], cfg["embed_size"])
    return out


def decoder_forward(p, trg, enc_out, src_kvalid, cfg):
    N, L = trg.shape
    E = cfg["embed_size"]
    x = (p["word_emb"][trg] + p["pos_emb"][jnp.arange(L)][None, :, :]).astype(
        jnp.bfloat16)
    for layer in p["layers"]:
        x = decoder_block_forward(layer, x, enc_out, src_kvalid,
                                  cfg["heads"], E)
    logits = dense(x.reshape(-1, E), p["W_out"], p["b_out"])  # vocab padded 128
    logits = logits[:, :cfg["trg_vocab_size"]]
    return logits.reshape(N, L, cfg["trg_vocab_size"])


def transformer_forward(params, src, trg, cfg):
    N, Ls = src.shape
    src_kvalid = (src != cfg["src_pad_idx"]).astype(jnp.float32).reshape(N, 1, Ls)
    enc_src = encoder_forward(params["encoder"], src, src_kvalid, cfg)
    out = decoder_forward(params["decoder"], trg, enc_src, src_kvalid, cfg)
    return out
    # TODO(synk): dropout layers are identity here (reference default dropout=0).


# ----------------------------------------------------------------------------
# Deterministic parameter init (weights in bf16, biases/LN params in f32)
# ----------------------------------------------------------------------------
def _nrm(key, shape, scale=0.02):
    return (scale * jax.random.normal(key, shape)).astype(jnp.float32)


def init_attn(key, E):
    ks = jax.random.split(key, 2)
    return {
        "Wqkv": _nrm(ks[0], (E, 3 * E)).astype(jnp.bfloat16),  # [Wq | Wk | Wv]
        "Wo": _nrm(ks[1], (E, E)).astype(jnp.bfloat16),
        "bo": jnp.zeros((1, E), jnp.float32),
    }


def init_tblock(key, E, F):
    ks = jax.random.split(key, 3)
    return {
        "attn": init_attn(ks[0], E),
        "ln1_g": jnp.ones((1, E), jnp.float32),
        "ln1_b": jnp.zeros((1, E), jnp.float32),
        "ln2_g": jnp.ones((1, E), jnp.float32),
        "ln2_b": jnp.zeros((1, E), jnp.float32),
        "W1": _nrm(ks[1], (E, F * E)).astype(jnp.bfloat16),
        "b1": jnp.zeros((1, F * E), jnp.float32),
        "W2": _nrm(ks[2], (F * E, E)).astype(jnp.bfloat16),
        "b2": jnp.zeros((1, E), jnp.float32),
    }


def init_dblock(key, E, F):
    ks = jax.random.split(key, 2)
    return {
        "self_attn": init_attn(ks[0], E),
        "ln_g": jnp.ones((1, E), jnp.float32),
        "ln_b": jnp.zeros((1, E), jnp.float32),
        "tblock": init_tblock(ks[1], E, F),
    }


def init_transformer(key, cfg):
    E, F = cfg["embed_size"], cfg["forward_expansion"]
    L = cfg["num_layers"]
    V = cfg["trg_vocab_size"]
    Vp = ((V + 127) // 128) * 128          # lane-dense padded vocab projection
    ks = jax.random.split(key, 7)
    enc = {
        "word_emb": _nrm(ks[0], (cfg["src_vocab_size"], E), 1.0),
        "pos_emb": _nrm(ks[1], (cfg["max_length"], E), 1.0),
        "layers": [init_tblock(k, E, F) for k in jax.random.split(ks[2], L)],
    }
    W_out = jnp.zeros((E, Vp), jnp.float32).at[:, :V].set(_nrm(ks[6], (E, V)))
    dec = {
        "word_emb": _nrm(ks[3], (cfg["trg_vocab_size"], E), 1.0),
        "pos_emb": _nrm(ks[4], (cfg["max_length"], E), 1.0),
        "layers": [init_dblock(k, E, F) for k in jax.random.split(ks[5], L)],
        "W_out": W_out.astype(jnp.bfloat16),
        "b_out": jnp.zeros((1, Vp), jnp.float32),
    }
    return {"encoder": enc, "decoder": dec}


# ----------------------------------------------------------------------------
if __name__ == "__main__":
    cfg = dict(
        src_vocab_size=37,
        trg_vocab_size=41,
        src_pad_idx=0,
        trg_pad_idx=0,
        embed_size=32,
        num_layers=2,
        forward_expansion=4,
        heads=4,
        max_length=16,
    )
    key = jax.random.PRNGKey(0)
    kp, ks, kt = jax.random.split(key, 3)

    params = init_transformer(kp, cfg)

    N, Ls, Lt = 2, 8, 8
    src = jax.random.randint(ks, (N, Ls), 1, cfg["src_vocab_size"], dtype=jnp.int32)
    src = src.at[:, -2:].set(cfg["src_pad_idx"])  # a couple of pad tokens
    trg = jax.random.randint(kt, (N, Lt), 1, cfg["trg_vocab_size"], dtype=jnp.int32)

    out = transformer_forward(params, src, trg, cfg)
    jax.block_until_ready(out)
    assert out.shape == (N, Lt, cfg["trg_vocab_size"])
    assert bool(jnp.all(jnp.isfinite(out)))
    print("KERNEL_OK")
</pallas_src>

<mosaic_0001>
module attributes {stable_mosaic.version = 11 : i64} {
  func.func @_proj_split_kernel(%arg0: i32, %arg1: i32, %arg2: memref<16x32xbf16, #tpu.memory_space<vmem>>, %arg3: memref<32x96xbf16, #tpu.memory_space<vmem>>, %arg4: memref<16x32xbf16, #tpu.memory_space<vmem>>, %arg5: memref<16x32xbf16, #tpu.memory_space<vmem>>, %arg6: memref<16x32xbf16, #tpu.memory_space<vmem>>, %arg7: memref<16x96xf32, #tpu.memory_space<vmem>>) attributes {dimension_semantics = [#tpu.dimension_semantics<parallel>, #tpu.dimension_semantics<arbitrary>], iteration_bounds = array<i64: 1, 1>, scalar_prefetch = 0 : i64, scratch_operands = 1 : i64, tpu.core_type = #tpu.core_type<tc>, window_params = [{transform_indices = @transform_0, window_bounds = array<i64: 16, 32>}, {transform_indices = @transform_1, window_bounds = array<i64: 32, 96>}, {transform_indices = @transform_2, window_bounds = array<i64: 16, 32>}, {transform_indices = @transform_3, window_bounds = array<i64: 16, 32>}, {transform_indices = @transform_4, window_bounds = array<i64: 16, 32>}]} {
    %c0_i32 = arith.constant 0 : i32
    %0 = arith.cmpi eq, %arg1, %c0_i32 : i32
    %1 = arith.extui %0 : i1 to i32
    %c0_i32_0 = arith.constant 0 : i32
    %2 = arith.cmpi ne, %1, %c0_i32_0 : i32
    scf.if %2 {
      %cst_10 = arith.constant 0.000000e+00 : f32
      %12 = vector.broadcast %cst_10 : f32 to vector<16x96xf32>
      %c0_11 = arith.constant 0 : index
      %c0_12 = arith.constant 0 : index
      %13 = vector.load %arg7[%c0_11, %c0_12] : memref<16x96xf32, #tpu.memory_space<vmem>>, vector<16x96xf32>
      tpu.vector_store %arg7[%c0_11, %c0_12], %12 {strides = array<i32>} : memref<16x96xf32, #tpu.memory_space<vmem>>, vector<16x96xf32>,
    } else {
    }
    %c0 = arith.constant 0 : index
    %c0_1 = arith.constant 0 : index
    %3 = vector.load %arg7[%c0, %c0_1] : memref<16x96xf32, #tpu.memory_space<vmem>>, vector<16x96xf32>
    %c0_2 = arith.constant 0 : index
    %c0_3 = arith.constant 0 : index
    %4 = vector.load %arg2[%c0_2, %c0_3] : memref<16x32xbf16, #tpu.memory_space<vmem>>, vector<16x32xbf16>
    %c0_4 = arith.constant 0 : index
    %c0_5 = arith.constant 0 : index
    %5 = vector.load %arg3[%c0_4, %c0_5] : memref<32x96xbf16, #tpu.memory_space<vmem>>, vector<32x96xbf16>
    %cst = arith.constant dense<0.000000e+00> : vector<16x96xf32>
    %6 = tpu.matmul %4, %5, %cst {dimension_numbers = #tpu.dot_dimension_numbers<[1], [0], [0], [1], [0, 0, 1, 1], [], []>} : vector<16x32xbf16>, vector<32x96xbf16>, vector<16x96xf32> -> vector<16x96xf32>
    %7 = arith.addf %3, %6 : vector<16x96xf32>
    %c0_6 = arith.constant 0 : index
    %c0_7 = arith.constant 0 : index
    %8 = vector.load %arg7[%c0_6, %c0_7] : memref<16x96xf32, #tpu.memory_space<vmem>>, vector<16x96xf32>
    tpu.vector_store %arg7[%c0_6, %c0_7], %7 {strides = array<i32>} : memref<16x96xf32, #tpu.memory_space<vmem>>, vector<16x96xf32>,
    %c0_i32_8 = arith.constant 0 : i32
    %9 = arith.cmpi eq, %arg1, %c0_i32_8 : i32
    %10 = arith.extui %9 : i1 to i32
    %c0_i32_9 = arith.constant 0 : i32
    %11 = arith.cmpi ne, %10, %c0_i32_9 : i32
    scf.if %11 {
      %c0_10 = arith.constant 0 : index
      %c0_11 = arith.constant 0 : index
      %12 = vector.load %arg7[%c0_10, %c0_11] : memref<16x96xf32, #tpu.memory_space<vmem>>, vector<16x32xf32>
      %13 = arith.truncf %12 : vector<16x32xf32> to vector<16x32xbf16>
      %c0_12 = arith.constant 0 : index
      %c0_13 = arith.constant 0 : index
      %14 = vector.load %arg4[%c0_12, %c0_13] : memref<16x32xbf16, #tpu.memory_space<vmem>>, vector<16x32xbf16>
      tpu.vector_store %arg4[%c0_12, %c0_13], %13 {strides = array<i32>} : memref<16x32xbf16, #tpu.memory_space<vmem>>, vector<16x32xbf16>,
      %c0_14 = arith.constant 0 : index
      %c32 = arith.constant 32 : index
      %15 = vector.load %arg7[%c0_14, %c32] : memref<16x96xf32, #tpu.memory_space<vmem>>, vector<16x32xf32>
      %16 = arith.truncf %15 : vector<16x32xf32> to vector<16x32xbf16>
      %c0_15 = arith.constant 0 : index
      %c0_16 = arith.constant 0 : index
      %17 = vector.load %arg5[%c0_15, %c0_16] : memref<16x32xbf16, #tpu.memory_space<vmem>>, vector<16x32xbf16>
      tpu.vector_store %arg5[%c0_15, %c0_16], %16 {strides = array<i32>} : memref<16x32xbf16, #tpu.memory_space<vmem>>, vector<16x32xbf16>,
      %c0_17 = arith.constant 0 : index
      %c64 = arith.constant 64 : index
      %18 = vector.load %arg7[%c0_17, %c64] : memref<16x96xf32, #tpu.memory_space<vmem>>, vector<16x32xf32>
      %19 = arith.truncf %18 : vector<16x32xf32> to vector<16x32xbf16>
      %c0_18 = arith.constant 0 : index
      %c0_19 = arith.constant 0 : index
      %20 = vector.load %arg6[%c0_18, %c0_19] : memref<16x32xbf16, #tpu.memory_space<vmem>>, vector<16x32xbf16>
      tpu.vector_store %arg6[%c0_18, %c0_19], %19 {strides = array<i32>} : memref<16x32xbf16, #tpu.memory_space<vmem>>, vector<16x32xbf16>,
    } else {
    }
    return
  }
  func.func @transform_0(%arg0: i32, %arg1: i32) -> (i32, i32) {
    %c0_i32 = arith.constant 0 : i32
    return %arg0, %arg1 : i32, i32
  }
  func.func @transform_1(%arg0: i32, %arg1: i32) -> (i32, i32) {
    %c0_i32 = arith.constant 0 : i32
    %c0_i32_0 = arith.constant 0 : i32
    return %arg1, %c0_i32 : i32, i32
  }
  func.func @transform_2(%arg0: i32, %arg1: i32) -> (i32, i32) {
    %c0_i32 = arith.constant 0 : i32
    %c0_i32_0 = arith.constant 0 : i32
    return %arg0, %c0_i32 : i32, i32
  }
  func.func @transform_3(%arg0: i32, %arg1: i32) -> (i32, i32) {
    %c0_i32 = arith.constant 0 : i32
    %c0_i32_0 = arith.constant 0 : i32
    return %arg0, %c0_i32 : i32, i32
  }
  func.func @transform_4(%arg0: i32, %arg1: i32) -> (i32, i32) {
    %c0_i32 = arith.constant 0 : i32
    %c0_i32_0 = arith.constant 0 : i32
    return %arg0, %c0_i32 : i32, i32
  }
}

</mosaic_0001>

<llo_original>
// kernel: tpu_custom_call.1
$region0: #{tpu_custom_call.1}
  #allocation0 [shape = 'u32[]', space=smem, size = 0x4, offset = 0x4, fixed_abs, tag = 'smem constant byte address 0x4 - core index']
  #allocation1 [shape = 'u32[144,128]{1,0:T(1,128)}', space=vmem, size = 0x12000, scoped, tag = 'internal scratch']
  #allocation2 [shape = 'f32[16,96]{1,0:T(8,128)}', space=vmem, size = 0x2000, scoped, tag = 'scratch operand']
  %s0 = inlined_call_operand.hbm [shape: bf16[16,32], index: 0, kind: input, shape index: {}]
  %s1 = inlined_call_operand.hbm [shape: bf16[32,96], index: 1, kind: input, shape index: {}]
  %s2 = inlined_call_operand.hbm [shape: bf16[16,32], index: 2, kind: output, shape index: {0}]
  %s3 = inlined_call_operand.hbm [shape: bf16[16,32], index: 3, kind: output, shape index: {1}]
  %s4 = inlined_call_operand.hbm [shape: bf16[16,32], index: 4, kind: output, shape index: {2}]
  %5 = xla_tuple %s2, %s3, %s4
  %s6 = sld [smem:[#allocation0]]
  $region50: #{tpu_custom_call.1} parent=0
    _
  %s8 = ssub.s32 1, %s6
  %s9 = scalar_select 0, %s8, %s6
  $region1: #{tpu_custom_call.1} parent=0
    #allocation3 [shape = 'u8[4096]{0}', space=vmem, size = 0x1000, scoped, tag = 'input window, operand 0, single buffered']
    #allocation4 [shape = 's32[1]{0}', space=sflag, size = 0x4, scoped, tag = 'scoped memory for tpu_custom_call.1']
    #allocation5 [shape = 's32[1]{0}', space=sflag, size = 0x4, scoped, tag = 'scoped memory for tpu_custom_call.1']
    #allocation6 [shape = 'u8[8192]{0}', space=vmem, size = 0x2000, scoped, tag = 'input window, operand 1, single buffered']
    #allocation7 [shape = 's32[1]{0}', space=sflag, size = 0x4, scoped, tag = 'scoped memory for tpu_custom_call.1']
    #allocation8 [shape = 'u8[4096]{0}', space=vmem, size = 0x1000, scoped, tag = 'output window, operand 0, single buffered']
    #allocation9 [shape = 'u8[4096]{0}', space=vmem, size = 0x1000, scoped, tag = 'output window, operand 1, single buffered']
    #allocation10 [shape = 's32[1]{0}', space=sflag, size = 0x4, scoped, tag = 'scoped memory for tpu_custom_call.1']
    #allocation11 [shape = 'u8[4096]{0}', space=vmem, size = 0x1000, scoped, tag = 'output window, operand 2, single buffered']
    %10 = vsyncpa [#allocation4], 0
    %11 = vsyncpa [#allocation7], 0
    %12 = vsyncpa [#allocation5], 0
    %13 = vsyncpa [#allocation10], 0
    // Predicated region
    $region2: #{tpu_custom_call.1} parent=1 // pred_check
      _
    $region3: #{tpu_custom_call.1} parent=1 // pred_check_branch
      %15 = sbr.rel (0) target = $region5
    $region4: #{tpu_custom_call.1} parent=1 // pred_region
      %s17 = ssub.s32 128, 128
      %18 = vsyncadd [#allocation4], %s17
      %s19 = sshll.u32 [#allocation3], 4
      %s20 = int_to_ptr.vmem [resolvable:$true] %s19
      %25 = dma.hbm_to_vmem [thread:$0]  %s0, 128, %s20, [#allocation4], 64, 64, 4
    $region5: #{tpu_custom_call.1} parent=1 // pred_fallthru
      _
    // Predicated region
    $region6: #{tpu_custom_call.1} parent=1 // pred_check
      _
    $region7: #{tpu_custom_call.1} parent=1 // pred_check_branch
      %27 = sbr.rel (0) target = $region9
    $region8: #{tpu_custom_call.1} parent=1 // pred_region
      %s29 = ssub.s32 256, 256
      %30 = vsyncadd [#allocation7], %s29
      %s31 = sshll.u32 [#allocation6], 4
      %s32 = int_to_ptr.vmem [resolvable:$true] %s31
      %37 = dma.hbm_to_vmem [thread:$0]  %s1, 256, %s32, [#allocation7], 64, 64, 4
    $region9: #{tpu_custom_call.1} parent=1 // pred_fallthru
      _
    // Predicated region
    $region10: #{tpu_custom_call.1} parent=1 // pred_check
      _
    $region11: #{tpu_custom_call.1} parent=1 // pred_check_branch
      %39 = sbr.rel (0) target = $region13
    $region12: #{tpu_custom_call.1} parent=1 // pred_region
      %40 = dma.done [#allocation4], 128
    $region13: #{tpu_custom_call.1} parent=1 // pred_fallthru
      _
    // Predicated region
    $region14: #{tpu_custom_call.1} parent=1 // pred_check
      _
    $region15: #{tpu_custom_call.1} parent=1 // pred_check_branch
      %42 = sbr.rel (0) target = $region17
    $region16: #{tpu_custom_call.1} parent=1 // pred_region
      %43 = dma.done [#allocation7], 256
    $region17: #{tpu_custom_call.1} parent=1 // pred_fallthru
      _
    %p45 = scmp.eq.s32.totalorder 0, 0
    // Predicated region
    $region18: #{tpu_custom_call.1} parent=1 // pred_check
      %p46 = pneg %p45
    $region19: #{tpu_custom_call.1} parent=1 // pred_check_branch
      %48 = sbr.rel (%p46) target = $region21
    $region20: #{tpu_custom_call.1} parent=1 // pred_region
      %vm49 = vcmask 785408
      %50 = vst.msk [vmem:[#allocation2] sm:$0xff] %vm49, 0.0
      %51 = vst.msk [vmem:[#allocation2 + $0x8] sm:$0xff] %vm49, 0.0
    $region21: #{tpu_custom_call.1} parent=1 // pred_fallthru
      _
    %v52 = vld [vmem:[#allocation2] sm:$0xff]
    %v53 = vld [vmem:[#allocation2 + $0x8] sm:$0xff]
    %v54 = vld [vmem:[#allocation3] sm:$0xf]
    %v55 = vld [vmem:[#allocation3 + $0x4] sm:$0xf]
    %v56 = vld [vmem:[#allocation6] sm:$0xf]
    %v57 = vld [vmem:[#allocation6 + $0x4] sm:$0xf]
    %v58 = vld [vmem:[#allocation6 + $0x8] sm:$0xf]
    %v59 = vld [vmem:[#allocation6 + $0xc] sm:$0xf]
    %v62 = vunpack.c.l.b16 %v54
    %v63 = vunpack.c.l.b16 %v55
    %v64 = vpack.c.b16 %v63, %v62
    %v69 = vunpack.c.l.b16 %v56
    %v70 = vunpack.c.l.b16 %v57
    %v71 = vunpack.c.l.b16 %v58
    %v72 = vunpack.c.l.b16 %v59
    %v73 = vpack.c.b16 %v70, %v69
    %v74 = vpack.c.b16 %v72, %v71
    %vm77 = vcmask 261120
    %v79 = vsel %vm77, %v64, 0
    %81 = vmatprep.subr.bf16.mxu0 0
    %82 = vmatpush1.bf16.msra.mxu0 %v73
    %83 = vmatprep.subr.bf16.mxu0 0
    %84 = vmatpush1.bf16.msra.mxu0 %v74
    %85 = vmatprep.subr.bf16.mxu0 0
    %86 = vmatpush1.bf16.msra.mxu0 0
    %87 = vmatprep.subr.bf16.mxu0 0
    %88 = vmatpush1.bf16.msra.mxu0 0
    %89 = vmatprep.subr.bf16.mxu0 0
    %90 = vmatpush1.bf16.msra.mxu0 0
    %91 = vmatprep.subr.bf16.mxu0 0
    %92 = vmatpush1.bf16.msra.mxu0 0
    %93 = vmatprep.subr.bf16.mxu0 0
    %94 = vmatpush1.bf16.msra.mxu0 0
    %95 = vmatprep.subr.bf16.mxu0 0
    %96 = vmatpush1.bf16.msra.mxu0 0
    %97 = vmatprep.subr.bf16.mxu0 0
    %98 = vmatpush1.bf16.msra.mxu0 0
    %99 = vmatprep.subr.bf16.mxu0 0
    %100 = vmatpush1.bf16.msra.mxu0 0
    %101 = vmatprep.subr.bf16.mxu0 0
    %102 = vmatpush1.bf16.msra.mxu0 0
    %103 = vmatprep.subr.bf16.mxu0 0
    %104 = vmatpush1.bf16.msra.mxu0 0
    %105 = vmatprep.subr.bf16.mxu0 0
    %106 = vmatpush1.bf16.msra.mxu0 0
    %107 = vmatprep.subr.bf16.mxu0 0
    %108 = vmatpush1.bf16.msra.mxu0 0
    %109 = vmatprep.subr.bf16.mxu0 0
    %110 = vmatpush1.bf16.msra.mxu0 0
    %111 = vmatprep.subr.bf16.mxu0 0
    %112 = vmatpush1.bf16.msra.mxu0 0
    %113 = vmatprep.mubr.bf16.mxu0 0
    %114 = vmatmul.mubr.bf16.gmra.mrb[0].mxu0 %v79
    %v115 = vpop.f32.mrb[0].mxu0
    %v116 = vadd.f32 0.0, %v115
    %v117 = vpop.f32.mrb[0].mxu0
    %v118 = vpop.f32.mrb[0].mxu0
    %v119 = vadd.f32 0.0, %v118
    %v120 = vpop.f32.mrb[0].mxu0
    %121 = vdwg.mxu0
    %v122 = vadd.f32 %v52, %v116
    %v123 = vadd.f32 %v53, %v119
    %vm124 = vcmask 785408
    %125 = vst.msk [vmem:[#allocation2] sm:$0xff] %vm124, %v122
    %126 = vst.msk [vmem:[#allocation2 + $0x8] sm:$0xff] %vm124, %v123
    // Predicated region
    $region22: #{tpu_custom_call.1} parent=1 // pred_check
      %p127 = pneg %p45
    $region23: #{tpu_custom_call.1} parent=1 // pred_check_branch
      %129 = sbr.rel (%p127) target = $region25
    $region24: #{tpu_custom_call.1} parent=1 // pred_region
      %v130 = vld [vmem:[#allocation2] sm:$0xff]
      %v131 = vld [vmem:[#allocation2 + $0x8] sm:$0xff]
      %v132 = vpack.c.bf16 %v131, %v130
      %v134 = vunpack.c.l.b16 %v132
      %v135 = vunpack.c.h.b16 %v132
      %v136 = vpack.c.b16 %v134, %v134
      %v137 = vpack.c.b16 %v135, %v135
      %vm140 = vcmask 257024
      %141 = vst.msk [vmem:[#allocation8] sm:$0xf] %vm140, %v136
      %142 = vst.msk [vmem:[#allocation8 + $0x4] sm:$0xf] %vm140, %v137
      %v143 = vld [vmem:[#allocation2] sm:$0xff]
      %v144 = vld [vmem:[#allocation2 + $0x8] sm:$0xff]
      %v145 = vpack.c.bf16 %v144, %v143
      %v147 = vunpack.c.l.b16 %v145
      %v148 = vunpack.c.h.b16 %v145
      %v149 = vpack.c.b16 %v147, %v147
      %v150 = vpack.c.b16 %v148, %v148
      %151 = vrot.lane.b32.xlu0 %v149, 96
      %v152 = vpop.permute.xlu0 %151
      %153 = vrot.lane.b32.xlu0 %v150, 96
      %v154 = vpop.permute.xlu0 %153
      %157 = vst.msk [vmem:[#allocation9] sm:$0xf] %vm140, %v152
      %158 = vst.msk [vmem:[#allocation9 + $0x4] sm:$0xf] %vm140, %v154
      %v159 = vld [vmem:[#allocation2] sm:$0xff]
      %v160 = vld [vmem:[#allocation2 + $0x8] sm:$0xff]
      %v161 = vpack.c.bf16 %v160, %v159
      %v163 = vunpack.c.l.b16 %v161
      %v164 = vunpack.c.h.b16 %v161
      %v165 = vpack.c.b16 %v163, %v163
      %v166 = vpack.c.b16 %v164, %v164
      %167 = vrot.lane.b32.xlu0 %v165, 64
      %v168 = vpop.permute.xlu0 %167
      %169 = vrot.lane.b32.xlu0 %v166, 64
      %v170 = vpop.permute.xlu0 %169
      %173 = vst.msk [vmem:[#allocation11] sm:$0xf] %vm140, %v168
      %174 = vst.msk [vmem:[#allocation11 + $0x4] sm:$0xf] %vm140, %v170
    $region25: #{tpu_custom_call.1} parent=1 // pred_fallthru
      _
    // Predicated region
    $region26: #{tpu_custom_call.1} parent=1 // pred_check
      _
    $region27: #{tpu_custom_call.1} parent=1 // pred_check_branch
      %176 = sbr.rel (0) target = $region29
    $region28: #{tpu_custom_call.1} parent=1 // pred_region
      %s178 = ssub.s32 128, 128
      %179 = vsyncadd [#allocation5], %s178
      %s180 = sshll.u32 [#allocation8], 4
      %s181 = int_to_ptr.vmem [resolvable:$true] %s180
      %186 = dma.vmem_to_hbm [thread:$0]  %s181, 128, %s2, [#allocation5], 64, 64, 4
    $region29: #{tpu_custom_call.1} parent=1 // pred_fallthru
      _
    // Predicated region
    $region30: #{tpu_custom_call.1} parent=1 // pred_check
      _
    $region31: #{tpu_custom_call.1} parent=1 // pred_check_branch
      %188 = sbr.rel (0) target = $region33
    $region32: #{tpu_custom_call.1} parent=1 // pred_region
      %s190 = ssub.s32 128, 128
      %191 = vsyncadd [#allocation10], %s190
      %s192 = sshll.u32 [#allocation9], 4
      %s193 = int_to_ptr.vmem [resolvable:$true] %s192
      %198 = dma.vmem_to_hbm [thread:$0]  %s193, 128, %s3, [#allocation10], 64, 64, 4
    $region33: #{tpu_custom_call.1} parent=1 // pred_fallthru
      _
    // Predicated region
    $region34: #{tpu_custom_call.1} parent=1 // pred_check
      _
    $region35: #{tpu_custom_call.1} parent=1 // pred_check_branch
      %200 = sbr.rel (0) target = $region37
    $region36: #{tpu_custom_call.1} parent=1 // pred_region
      %s202 = ssub.s32 128, 128
      %203 = vsyncadd [#allocation10], %s202
      %s204 = sshll.u32 [#allocation11], 4
      %s205 = int_to_ptr.vmem [resolvable:$true] %s204
      %210 = dma.vmem_to_hbm [thread:$0]  %s205, 128, %s4, [#allocation10], 64, 64, 4
    $region37: #{tpu_custom_call.1} parent=1 // pred_fallthru
      _
    // Predicated region
    $region38: #{tpu_custom_call.1} parent=1 // pred_check
      _
    $region39: #{tpu_custom_call.1} parent=1 // pred_check_branch
      %212 = sbr.rel (0) target = $region41
    $region40: #{tpu_custom_call.1} parent=1 // pred_region
      %213 = dma.done [#allocation5], 128
    $region41: #{tpu_custom_call.1} parent=1 // pred_fallthru
      _
    // Predicated region
    $region42: #{tpu_custom_call.1} parent=1 // pred_check
      _
    $region43: #{tpu_custom_call.1} parent=1 // pred_check_branch
      %215 = sbr.rel (0) target = $region45
    $region44: #{tpu_custom_call.1} parent=1 // pred_region
      %216 = dma.done [#allocation10], 128
    $region45: #{tpu_custom_call.1} parent=1 // pred_fallthru
      _
    // Predicated region
    $region46: #{tpu_custom_call.1} parent=1 // pred_check
      _
    $region47: #{tpu_custom_call.1} parent=1 // pred_check_branch
      %218 = sbr.rel (0) target = $region49
    $region48: #{tpu_custom_call.1} parent=1 // pred_region
      %219 = dma.done [#allocation10], 128
    $region49: #{tpu_custom_call.1} parent=1 // pred_fallthru
      _
    %220 = vsyncpa [#allocation4], 1
    %221 = vsyncpa [#allocation7], 1
    %222 = vsyncpa [#allocation5], 1
    %223 = vsyncpa [#allocation10], 1

</llo_original>
